<compile_context>
chip_gen: v5e
topology: v5e:2x2
jax: 0.10.0
libtpu: 0.0.40
codegen_flags: <defaults>
</compile_context>

<pallas_src>
import numpy as np
import jax
import jax.numpy as jnp
from jax import lax
from jax.experimental import pallas as pl
from jax.experimental.pallas import tpu as pltpu


MXU_DTYPE = jnp.bfloat16      # matmul-operand dtype (accumulation stays f32)
_SINGLE_BUF_OK = None         # lazily-probed pl.Buffered(1) support


def _round_up(x, m):
    return (x + m - 1) // m * m


def _vmem_limit_bytes(working_set_bytes, headroom=4 << 20):
    """Scoped-VMEM request: actual working set + headroom, clamped to
    [16 MiB, 32 MiB] so it is safe on every generation (v7x physical = 64)."""
    return int(min(32 << 20, max(16 << 20, int(working_set_bytes) + headroom)))


def _pick_time_chunk(T, Bp, g_in, g_out, budget_bytes=4 << 20, max_unroll=16):
    """Timesteps per grid iteration: as many as fit a modest streamed-block
    budget, capped so the fully-unrolled in-kernel loop stays small."""
    per_step = Bp * (g_in + g_out) * 4
    return int(max(1, min(T, max_unroll, budget_bytes // max(per_step, 1))))


# ----------------------------------------------------------------------------
# Probe: does this Pallas build accept pipeline_mode=pl.Buffered(1)?
# (Used only for constant-index weight blocks, where a single buffer is both
# correct and halves the weight VMEM footprint.)
# ----------------------------------------------------------------------------
def _supports_single_buffering():
    global _SINGLE_BUF_OK
    if _SINGLE_BUF_OK is None:
        def _copy_kernel(x_ref, o_ref):
            o_ref[...] = x_ref[...]
        try:
            x = jnp.zeros((8, 128), jnp.float32)
            out = pl.pallas_call(
                _copy_kernel,
                out_shape=jax.ShapeDtypeStruct((16, 128), jnp.float32),
                grid=(2,),
                in_specs=[pl.BlockSpec((8, 128), lambda i: (0, 0),
                                       pipeline_mode=pl.Buffered(1))],
                out_specs=pl.BlockSpec((8, 128), lambda i: (i, 0)),
            )(x)
            jax.block_until_ready(out)
            _SINGLE_BUF_OK = True
        except Exception:
            _SINGLE_BUF_OK = False
    return _SINGLE_BUF_OK


def _resident_spec(block_shape, index_map):
    """BlockSpec for a block whose index never changes across the grid."""
    if _supports_single_buffering():
        return pl.BlockSpec(block_shape, index_map,
                            pipeline_mode=pl.Buffered(1))
    return pl.BlockSpec(block_shape, index_map)


# ----------------------------------------------------------------------------
# Pallas kernel: tiled (M, K) @ (K, N) + bias matmul on the MXU.
# Used for the layer-0 input projection X @ W_ih + b and the final linear.
# The f32 activation block is cast to bf16 in-kernel (no wrapper cast pass);
# weights are already bf16.
# ----------------------------------------------------------------------------
def _matmul_bias_kernel(x_ref, w_ref, b_ref, o_ref):
    o_ref[...] = (jnp.dot(x_ref[...].astype(w_ref.dtype), w_ref[...],
                          preferred_element_type=jnp.float32)
                  + b_ref[...]).astype(o_ref.dtype)


def matmul_bias(x, w, b, *, tm_pref=256, tn_pref=512):
    """x: (M, K) f32; w: (K, N) bf16; b: (1, N) f32 -> (M, N) f32."""
    M, K = x.shape
    N = w.shape[1]
    tm = _round_up(M, 8) if M <= tm_pref else tm_pref
    tn = _round_up(N, 128) if N <= tn_pref else tn_pref
    Mp, Np = _round_up(M, tm), _round_up(N, tn)

    x_p = jnp.pad(x, ((0, Mp - M), (0, 0)))
    w_p = jnp.pad(w, ((0, 0), (0, Np - N)))
    b_p = jnp.pad(b, ((0, 0), (0, Np - N))).astype(jnp.float32)

    work = (2 * tm * K * 4        # x blocks (f32, double-buffered)
            + 2 * K * tn * w_p.dtype.itemsize
            + 2 * tn * 4          # bias blocks
            + 2 * tm * tn * 4)    # out blocks

    out = pl.pallas_call(
        _matmul_bias_kernel,
        out_shape=jax.ShapeDtypeStruct((Mp, Np), jnp.float32),
        grid_spec=pltpu.PrefetchScalarGridSpec(
            num_scalar_prefetch=0,
            grid=(Mp // tm, Np // tn),
            in_specs=[
                pl.BlockSpec((tm, K), lambda i, j: (i, 0)),
                pl.BlockSpec((K, tn), lambda i, j: (0, j)),
                pl.BlockSpec((1, tn), lambda i, j: (0, j)),
            ],
            out_specs=pl.BlockSpec((tm, tn), lambda i, j: (i, j)),
        ),
        compiler_params=pltpu.CompilerParams(
            dimension_semantics=("parallel", "parallel"),
            vmem_limit_bytes=_vmem_limit_bytes(work)),
    )(x_p, w_p, b_p)
    return out[:M, :N]


# ----------------------------------------------------------------------------
# Pallas kernel: fused multi-layer LSTM recurrence.
# Grid iterates over time CHUNKS; inside, a fully-unrolled loop walks Tc steps
# and, per step, all num_layers layers.  Layer l+1's input projection is
# computed from h^l_t while it is still in VMEM scratch (no inter-layer HBM
# traffic).  h/c live in a (L, Bp, H) VMEM scratch that persists across the
# time grid; per-step valid-row counts come from SMEM (scalar prefetch).
# ----------------------------------------------------------------------------
def _make_lstm_stack_kernel(Tc, H, num_layers):
    def kernel(nvalid_ref, *refs):
        xproj_ref = refs[0]
        pos = 1
        whh_refs = list(refs[pos:pos + num_layers]); pos += num_layers
        wih_refs, bias_refs = [], []
        for _ in range(num_layers - 1):
            wih_refs.append(refs[pos]); bias_refs.append(refs[pos + 1]); pos += 2
        out_ref, h_sc, c_sc = refs[pos], refs[pos + 1], refs[pos + 2]

        c_idx = pl.program_id(0)

        @pl.when(c_idx == 0)
        def _():
            h_sc[...] = jnp.zeros_like(h_sc)
            c_sc[...] = jnp.zeros_like(c_sc)

        Bp = h_sc.shape[1]
        # Loop-invariant row-id plane, hoisted out of the time loop.
        row_ids = lax.broadcasted_iota(jnp.int32, (Bp, 1), 0)
        t_base = c_idx * Tc

        for i in range(Tc):                       # fully unrolled (Tc <= 16)
            # Packed-sequence semantics: rows >= n_valid(t) are padding.
            live = row_ids < nvalid_ref[t_base + i]
            x_gates = xproj_ref[i]                # (Bp, 4H), layer-0 x@W_ih+b
            for l in range(num_layers):
                gates = x_gates + jnp.dot(
                    h_sc[l].astype(whh_refs[l].dtype), whh_refs[l][...],
                    preferred_element_type=jnp.float32)
                # PyTorch gate order [i | f | g | o]; lane-aligned for H%128==0.
                i_g = jax.nn.sigmoid(gates[:, 0 * H:1 * H])
                f_g = jax.nn.sigmoid(gates[:, 1 * H:2 * H])
                g_g = jnp.tanh(gates[:, 2 * H:3 * H])
                o_g = jax.nn.sigmoid(gates[:, 3 * H:4 * H])
                c_new = f_g * c_sc[l] + i_g * g_g
                h_new = o_g * jnp.tanh(c_new)
                h_sc[l] = jnp.where(live, h_new, h_sc[l])
                c_sc[l] = jnp.where(live, c_new, c_sc[l])
                if l + 1 < num_layers:
                    # Next layer's input projection, fused while h is in VMEM.
                    x_gates = (jnp.dot(h_sc[l].astype(wih_refs[l].dtype),
                                       wih_refs[l][...],
                                       preferred_element_type=jnp.float32)
                               + bias_refs[l][...])
            out_ref[i] = h_sc[num_layers - 1].astype(out_ref.dtype)
    return kernel


def lstm_stack_recurrence(n_valid_np, xproj0, layers):
    """n_valid_np: (T,) int32 (numpy, static); xproj0: (T, Bp, 4H) f32
    (= X @ W_ih^0 + b^0); layers: list of dicts with bf16 'w_hh'/'w_ih' and
    f32 'bias'.  Returns last-layer h_all: (T, Bp, H) f32."""
    T, Bp, G = xproj0.shape
    L = len(layers)
    H = layers[0]["w_hh"].shape[0]

    Tc = _pick_time_chunk(T, Bp, G, H)
    Tp = _round_up(T, Tc)
    if Tp != T:
        xproj0 = jnp.pad(xproj0, ((0, Tp - T), (0, 0), (0, 0)))
    n_valid = jnp.asarray(
        np.pad(np.asarray(n_valid_np, np.int32), (0, Tp - T)), jnp.int32)

    in_specs = [pl.BlockSpec((Tc, Bp, G), lambda c, nv: (c, 0, 0))]
    inputs = [xproj0]
    for l in range(L):
        in_specs.append(_resident_spec((H, G), lambda c, nv: (0, 0)))
        inputs.append(layers[l]["w_hh"])
    for l in range(1, L):
        in_specs.append(_resident_spec((H, G), lambda c, nv: (0, 0)))
        inputs.append(layers[l]["w_ih"])
        in_specs.append(_resident_spec((1, G), lambda c, nv: (0, 0)))
        inputs.append(layers[l]["bias"])

    weight_bytes = L * H * G * 2 + (L - 1) * (H * G * 2 + G * 4)
    work = (2 * Tc * Bp * G * 4        # xproj blocks (double-buffered)
            + 2 * Tc * Bp * H * 4      # out blocks
            + 2 * weight_bytes         # weights (worst case double-buffered)
            + 2 * L * Bp * H * 4)      # h/c scratch

    out = pl.pallas_call(
        _make_lstm_stack_kernel(Tc, H, L),
        out_shape=jax.ShapeDtypeStruct((Tp, Bp, H), jnp.float32),
        grid_spec=pltpu.PrefetchScalarGridSpec(
            num_scalar_prefetch=1,
            grid=(Tp // Tc,),
            in_specs=in_specs,
            out_specs=pl.BlockSpec((Tc, Bp, H), lambda c, nv: (c, 0, 0)),
            scratch_shapes=[
                pltpu.VMEM((L, Bp, H), jnp.float32),
                pltpu.VMEM((L, Bp, H), jnp.float32),
            ],
        ),
        compiler_params=pltpu.CompilerParams(
            dimension_semantics=("arbitrary",),
            vmem_limit_bytes=_vmem_limit_bytes(work)),
    )(n_valid, *inputs)
    return out[:T]


# ----------------------------------------------------------------------------
# DecoderRNN forward (glue in plain JAX, compute in Pallas kernels).
# ----------------------------------------------------------------------------
def decoder_rnn_forward(params, features, captions, lengths):
    """
    features : (B, E) float32       image feature vectors
    captions : (B, T) int32         token ids
    lengths  : python list[int], sorted descending, lengths[b] <= T+1
    returns  : (sum(lengths), vocab) float32 -- linear applied to the packed
               LSTM output data, as in the PyTorch module.
    """
    B, Tcap = captions.shape
    seq_len = Tcap + 1
    lengths = [int(l) for l in lengths]
    assert all(lengths[i] >= lengths[i + 1] for i in range(len(lengths) - 1)), \
        "pack_padded_sequence requires lengths sorted descending"

    # Embedding lookup + concat image features at t=0 (glue).
    emb = jnp.take(params["embed"], captions, axis=0)            # (B, T, E)
    emb = jnp.concatenate([features[:, None, :], emb], axis=1)   # (B, T+1, E)

    # Time-major, batch padded to a sublane multiple (padded rows stay masked).
    x = jnp.transpose(emb, (1, 0, 2)).astype(jnp.float32)        # (T+1, B, E)
    Bp = _round_up(B, 8)
    if Bp != B:
        x = jnp.pad(x, ((0, 0), (0, Bp - B), (0, 0)))

    # Valid-rows-per-timestep table (static: lengths is a static python list).
    n_valid = np.asarray([sum(1 for L in lengths if L > t)
                          for t in range(seq_len)], dtype=np.int32)

    layers = params["lstm"]
    e_in = x.shape[-1]

    # Layer-0 input projection hoisted out of the recurrence: one big tiled
    # MXU matmul over all (T+1)*Bp rows.
    xproj0 = matmul_bias(x.reshape(seq_len * Bp, e_in),
                         layers[0]["w_ih"], layers[0]["bias"])
    xproj0 = xproj0.reshape(seq_len, Bp, -1)

    # Fused multi-layer recurrence (one pallas_call, in-kernel time loop).
    h = lstm_stack_recurrence(n_valid, xproj0, layers)           # (T+1, Bp, H)

    # Gather packed order (pack_padded_sequence, batch_first=True, sorted
    # descending): time-major over still-valid batch entries.
    # TODO(synk): fuse this gather into the final linear via scalar prefetch.
    packed_idx = [(t, b) for t in range(seq_len) for b in range(B)
                  if lengths[b] > t]
    t_ids = jnp.asarray([p[0] for p in packed_idx], dtype=jnp.int32)
    b_ids = jnp.asarray([p[1] for p in packed_idx], dtype=jnp.int32)
    h_packed = h[t_ids, b_ids, :]                                # (N, H)

    # Final linear (tiled over rows x vocab inside matmul_bias).
    return matmul_bias(h_packed, params["lin_w"], params["lin_b"])


# ----------------------------------------------------------------------------
# Deterministic parameter construction (matching nn.Module shapes).
# Matmul weights are pre-cast to bf16 ONCE here (MXU-operand dtype); biases
# and the embedding table stay f32.
# ----------------------------------------------------------------------------
def make_params(key, embed_size, hidden_size, vocab_size, num_layers):
    ks = jax.random.split(key, 2 + 4 * num_layers)
    k_it = iter(ks)
    scale = 1.0 / np.sqrt(hidden_size)

    params = {
        # nn.Embedding(vocab_size, embed_size)
        "embed": jax.random.normal(next(k_it), (vocab_size, embed_size),
                                   jnp.float32),
        "lstm": [],
        # nn.Linear(hidden_size, vocab_size): stored transposed (H, V), bf16
        "lin_w": jax.random.uniform(next(k_it), (hidden_size, vocab_size),
                                    jnp.float32, -scale, scale
                                    ).astype(MXU_DTYPE),
    }
    params["lin_b"] = jnp.zeros((1, vocab_size), jnp.float32)

    for l in range(num_layers):
        in_size = embed_size if l == 0 else hidden_size
        w_ih = jax.random.uniform(next(k_it), (in_size, 4 * hidden_size),
                                  jnp.float32, -scale, scale)
        w_hh = jax.random.uniform(next(k_it), (hidden_size, 4 * hidden_size),
                                  jnp.float32, -scale, scale)
        b_ih = jax.random.uniform(next(k_it), (1, 4 * hidden_size),
                                  jnp.float32, -scale, scale)
        b_hh = jax.random.uniform(next(k_it), (1, 4 * hidden_size),
                                  jnp.float32, -scale, scale)
        params["lstm"].append(
            {"w_ih": w_ih.astype(MXU_DTYPE),
             "w_hh": w_hh.astype(MXU_DTYPE),
             "bias": (b_ih + b_hh).astype(jnp.float32)})
    return params


# ----------------------------------------------------------------------------
# Pure-JAX reference (same math, same bf16 MXU-operand rounding).
# ----------------------------------------------------------------------------
def _mxu_dot(a, b):
    return jnp.dot(a.astype(MXU_DTYPE), b.astype(MXU_DTYPE),
                   preferred_element_type=jnp.float32)


def reference_forward(params, features, captions, lengths):
    B, Tcap = captions.shape
    seq_len = Tcap + 1
    emb = jnp.take(params["embed"], captions, axis=0)
    emb = jnp.concatenate([features[:, None, :], emb], axis=1)
    x = jnp.transpose(emb, (1, 0, 2)).astype(jnp.float32)

    lengths_arr = jnp.asarray(lengths, dtype=jnp.int32)
    mask = (jnp.arange(seq_len)[:, None] < lengths_arr[None, :]
            ).astype(jnp.float32)[:, :, None]

    H = params["lstm"][0]["w_hh"].shape[0]
    h_in = x
    for layer in params["lstm"]:
        def step(carry, inp, layer=layer):
            h, c = carry
            x_t, m_t = inp
            gates = (_mxu_dot(x_t, layer["w_ih"])
                     + _mxu_dot(h, layer["w_hh"]) + layer["bias"])
            i = jax.nn.sigmoid(gates[:, 0 * H:1 * H])
            f = jax.nn.sigmoid(gates[:, 1 * H:2 * H])
            g = jnp.tanh(gates[:, 2 * H:3 * H])
            o = jax.nn.sigmoid(gates[:, 3 * H:4 * H])
            c_new = f * c + i * g
            h_new = o * jnp.tanh(c_new)
            h = m_t * h_new + (1 - m_t) * h
            c = m_t * c_new + (1 - m_t) * c
            return (h, c), h

        B_ = x.shape[1]
        init = (jnp.zeros((B_, H), jnp.float32),
                jnp.zeros((B_, H), jnp.float32))
        _, h_in = lax.scan(step, init, (h_in, mask))

    packed_idx = [(t, b) for t in range(seq_len) for b in range(B)
                  if lengths[b] > t]
    t_ids = jnp.asarray([p[0] for p in packed_idx], dtype=jnp.int32)
    b_ids = jnp.asarray([p[1] for p in packed_idx], dtype=jnp.int32)
    h_packed = h_in[t_ids, b_ids, :]
    return _mxu_dot(h_packed, params["lin_w"]) + params["lin_b"]


if __name__ == "__main__":
    # Small, lane/sublane-friendly shapes consistent with the module.
    embed_size = 128
    hidden_size = 128
    vocab_size = 256
    num_layers = 2
    batch = 2
    cap_len = 8                      # captions: (B, T); LSTM sees T+1 = 9
    lengths = [9, 7]                 # sorted descending, <= T+1

    key = jax.random.PRNGKey(0)
    k_par, k_feat, k_cap = jax.random.split(key, 3)

    params = make_params(k_par, embed_size, hidden_size, vocab_size,
                         num_layers)
    features = jax.random.normal(k_feat, (batch, embed_size), jnp.float32)
    captions = jax.random.randint(k_cap, (batch, cap_len), 0, vocab_size,
                                  dtype=jnp.int32)

    out = decoder_rnn_forward(params, features, captions, lengths)
    out = jax.block_until_ready(out)

    ref = jax.block_until_ready(
        reference_forward(params, features, captions, lengths))

    assert out.shape == (sum(lengths), vocab_size), out.shape
    np.testing.assert_allclose(np.asarray(out), np.asarray(ref),
                               rtol=2e-2, atol=2e-2)
    print("KERNEL_OK")
</pallas_src>

<mosaic_0001>
module attributes {stable_mosaic.version = 11 : i64} {
  func.func @_matmul_bias_kernel(%arg0: i32, %arg1: i32, %arg2: memref<72x128xf32, #tpu.memory_space<vmem>>, %arg3: memref<128x512xbf16, #tpu.memory_space<vmem>>, %arg4: memref<1x512xf32, #tpu.memory_space<vmem>>, %arg5: memref<72x512xf32, #tpu.memory_space<vmem>>) attributes {dimension_semantics = [#tpu.dimension_semantics<parallel>, #tpu.dimension_semantics<parallel>], iteration_bounds = array<i64: 1, 1>, scalar_prefetch = 0 : i64, scratch_operands = 0 : i64, tpu.core_type = #tpu.core_type<tc>, window_params = [{transform_indices = @transform_0, window_bounds = array<i64: 72, 128>}, {transform_indices = @transform_1, window_bounds = array<i64: 128, 512>}, {transform_indices = @transform_2, window_bounds = array<i64: 1, 512>}, {transform_indices = @transform_3, window_bounds = array<i64: 72, 512>}]} {
    %c0 = arith.constant 0 : index
    %c0_0 = arith.constant 0 : index
    %0 = vector.load %arg2[%c0, %c0_0] : memref<72x128xf32, #tpu.memory_space<vmem>>, vector<72x128xf32>
    %1 = arith.truncf %0 : vector<72x128xf32> to vector<72x128xbf16>
    %c0_1 = arith.constant 0 : index
    %c0_2 = arith.constant 0 : index
    %2 = vector.load %arg3[%c0_1, %c0_2] : memref<128x512xbf16, #tpu.memory_space<vmem>>, vector<128x512xbf16>
    %cst = arith.constant dense<0.000000e+00> : vector<72x512xf32>
    %3 = tpu.matmul %1, %2, %cst {dimension_numbers = #tpu.dot_dimension_numbers<[1], [0], [0], [1], [0, 0, 1, 1], [], []>} : vector<72x128xbf16>, vector<128x512xbf16>, vector<72x512xf32> -> vector<72x512xf32>
    %c0_3 = arith.constant 0 : index
    %c0_4 = arith.constant 0 : index
    %4 = vector.load %arg4[%c0_3, %c0_4] : memref<1x512xf32, #tpu.memory_space<vmem>>, vector<1x512xf32>
    %5 = vector.broadcast %4 : vector<1x512xf32> to vector<72x512xf32>
    %6 = arith.addf %3, %5 : vector<72x512xf32>
    %c0_5 = arith.constant 0 : index
    %c0_6 = arith.constant 0 : index
    %7 = vector.load %arg5[%c0_5, %c0_6] : memref<72x512xf32, #tpu.memory_space<vmem>>, vector<72x512xf32>
    tpu.vector_store %arg5[%c0_5, %c0_6], %6 {strides = array<i32>} : memref<72x512xf32, #tpu.memory_space<vmem>>, vector<72x512xf32>,
    return
  }
  func.func @transform_0(%arg0: i32, %arg1: i32) -> (i32, i32) {
    %c0_i32 = arith.constant 0 : i32
    %c0_i32_0 = arith.constant 0 : i32
    return %arg0, %c0_i32 : i32, i32
  }
  func.func @transform_1(%arg0: i32, %arg1: i32) -> (i32, i32) {
    %c0_i32 = arith.constant 0 : i32
    %c0_i32_0 = arith.constant 0 : i32
    return %c0_i32, %arg1 : i32, i32
  }
  func.func @transform_2(%arg0: i32, %arg1: i32) -> (i32, i32) {
    %c0_i32 = arith.constant 0 : i32
    %c0_i32_0 = arith.constant 0 : i32
    return %c0_i32, %arg1 : i32, i32
  }
  func.func @transform_3(%arg0: i32, %arg1: i32) -> (i32, i32) {
    %c0_i32 = arith.constant 0 : i32
    return %arg0, %arg1 : i32, i32
  }
}

</mosaic_0001>

<llo_original>
// kernel: tpu_custom_call.1
$region0: #{tpu_custom_call.1}
  #allocation0 [shape = 'u32[]', space=smem, size = 0x4, offset = 0x4, fixed_abs, tag = 'smem constant byte address 0x4 - core index']
  #allocation1 [shape = 'u32[72,128]{1,0:T(1,128)}', space=vmem, size = 0x9000, scoped, tag = 'internal scratch']
  %s0 = inlined_call_operand.hbm [shape: f32[72,128], index: 0, kind: input, shape index: {}]
  %s1 = inlined_call_operand.hbm [shape: bf16[128,512], index: 1, kind: input, shape index: {}]
  %s2 = inlined_call_operand.hbm [shape: f32[1,512], index: 2, kind: input, shape index: {}]
  %s3 = inlined_call_operand.hbm [shape: f32[72,512], index: 3, kind: output, shape index: {}]
  %s4 = sld [smem:[#allocation0]]
  $region34: #{tpu_custom_call.1} parent=0
    _
  %s6 = ssub.s32 1, %s4
  %s7 = scalar_select 0, %s6, %s4
  $region1: #{tpu_custom_call.1} parent=0
    #allocation2 [shape = 'u8[36864]{0}', space=vmem, size = 0x9000, scoped, tag = 'input window, operand 0, single buffered']
    #allocation3 [shape = 's32[1]{0}', space=sflag, size = 0x4, scoped, tag = 'scoped memory for tpu_custom_call.1']
    #allocation4 [shape = 's32[1]{0}', space=sflag, size = 0x4, scoped, tag = 'scoped memory for tpu_custom_call.1']
    #allocation5 [shape = 'u8[131072]{0}', space=vmem, size = 0x20000, scoped, tag = 'input window, operand 1, single buffered']
    #allocation6 [shape = 's32[1]{0}', space=sflag, size = 0x4, scoped, tag = 'scoped memory for tpu_custom_call.1']
    #allocation7 [shape = 'u8[2048]{0}', space=vmem, size = 0x800, scoped, tag = 'input window, operand 2, single buffered']
    #allocation8 [shape = 'u8[147456]{0}', space=vmem, size = 0x24000, scoped, tag = 'output window, operand 0, single buffered']
    %8 = vsyncpa [#allocation3], 0
    %9 = vsyncpa [#allocation6], 0
    %10 = vsyncpa [#allocation4], 0
    // Predicated region
    $region2: #{tpu_custom_call.1} parent=1 // pred_check
      _
    $region3: #{tpu_custom_call.1} parent=1 // pred_check_branch
      %12 = sbr.rel (0) target = $region5
    $region4: #{tpu_custom_call.1} parent=1 // pred_region
      %14 = vsyncadd [#allocation3], 0
      %s15 = sshll.u32 %s0, 4
      %s16 = int_to_ptr.hbm [resolvable:$true] %s15
      %s17 = sshll.u32 [#allocation2], 4
      %s18 = int_to_ptr.vmem [resolvable:$true] %s17
      %23 = dma.hbm_to_vmem [thread:$0]  %s16, 1152, %s18, [#allocation3], 128, 128, 8
    $region5: #{tpu_custom_call.1} parent=1 // pred_fallthru
      _
    // Predicated region
    $region6: #{tpu_custom_call.1} parent=1 // pred_check
      _
    $region7: #{tpu_custom_call.1} parent=1 // pred_check_branch
      %25 = sbr.rel (0) target = $region9
    $region8: #{tpu_custom_call.1} parent=1 // pred_region
      %27 = vsyncadd [#allocation6], 0
      %s28 = sshll.u32 %s1, 4
      %s29 = int_to_ptr.hbm [resolvable:$true] %s28
      %s30 = sshll.u32 [#allocation5], 4
      %s31 = int_to_ptr.vmem [resolvable:$true] %s30
      %36 = dma.hbm_to_vmem [thread:$0]  %s29, 4096, %s31, [#allocation6], 256, 256, 16
    $region9: #{tpu_custom_call.1} parent=1 // pred_fallthru
      _
    // Predicated region
    $region10: #{tpu_custom_call.1} parent=1 // pred_check
      _
    $region11: #{tpu_custom_call.1} parent=1 // pred_check_branch
      %38 = sbr.rel (0) target = $region13
    $region12: #{tpu_custom_call.1} parent=1 // pred_region
      %40 = vsyncadd [#allocation6], 0
      %s42 = sshll.u32 %s2, 4
      %s43 = int_to_ptr.hbm [resolvable:$true] %s42
      %s44 = sshll.u32 [#allocation7], 4
      %s45 = int_to_ptr.vmem [resolvable:$true] %s44
      %47 = dma.hbm_to_vmem [thread:$0]  %s43, 64, %s45, [#allocation6]
    $region13: #{tpu_custom_call.1} parent=1 // pred_fallthru
      _
    // Predicated region
    $region14: #{tpu_custom_call.1} parent=1 // pred_check
      _
    $region15: #{tpu_custom_call.1} parent=1 // pred_check_branch
      %49 = sbr.rel (0) target = $region17
    $region16: #{tpu_custom_call.1} parent=1 // pred_region
      %51 = dma.done [#allocation3], 1152
    $region17: #{tpu_custom_call.1} parent=1 // pred_fallthru
      _
    // Predicated region
    $region18: #{tpu_custom_call.1} parent=1 // pred_check
      _
    $region19: #{tpu_custom_call.1} parent=1 // pred_check_branch
      %53 = sbr.rel (0) target = $region21
    $region20: #{tpu_custom_call.1} parent=1 // pred_region
      %55 = dma.done [#allocation6], 4096
    $region21: #{tpu_custom_call.1} parent=1 // pred_fallthru
      _
    // Predicated region
    $region22: #{tpu_custom_call.1} parent=1 // pred_check
      _
    $region23: #{tpu_custom_call.1} parent=1 // pred_check_branch
      %57 = sbr.rel (0) target = $region25
    $region24: #{tpu_custom_call.1} parent=1 // pred_region
      %59 = dma.done [#allocation6], 64
    $region25: #{tpu_custom_call.1} parent=1 // pred_fallthru
      _
    %v60 = vld [vmem:[#allocation2] sm:$0xff]
    %v61 = vld [vmem:[#allocation2 + $0x8] sm:$0xff]
    %v62 = vld [vmem:[#allocation2 + $0x10] sm:$0xff]
    %v63 = vld [vmem:[#allocation2 + $0x18] sm:$0xff]
    %v64 = vld [vmem:[#allocation2 + $0x20] sm:$0xff]
    %v65 = vld [vmem:[#allocation2 + $0x28] sm:$0xff]
    %v66 = vld [vmem:[#allocation2 + $0x30] sm:$0xff]
    %v67 = vld [vmem:[#allocation2 + $0x38] sm:$0xff]
    %v68 = vld [vmem:[#allocation2 + $0x40] sm:$0xff]
    %v69 = vpack.c.bf16 %v61, %v60
    %v70 = vpack.c.bf16 %v63, %v62
    %v71 = vpack.c.bf16 %v65, %v64
    %v72 = vpack.c.bf16 %v67, %v66
    %v73 = vpack.c.bf16 %v68, %v68
    %v74 = vld [vmem:[#allocation5] sm:$0xff]
    %v75 = vld [vmem:[#allocation5 + $0x8] sm:$0xff]
    %v76 = vld [vmem:[#allocation5 + $0x10] sm:$0xff]
    %v77 = vld [vmem:[#allocation5 + $0x18] sm:$0xff]
    %v78 = vld [vmem:[#allocation5 + $0x20] sm:$0xff]
    %v79 = vld [vmem:[#allocation5 + $0x28] sm:$0xff]
    %v80 = vld [vmem:[#allocation5 + $0x30] sm:$0xff]
    %v81 = vld [vmem:[#allocation5 + $0x38] sm:$0xff]
    %v82 = vld [vmem:[#allocation5 + $0x40] sm:$0xff]
    %v83 = vld [vmem:[#allocation5 + $0x48] sm:$0xff]
    %v84 = vld [vmem:[#allocation5 + $0x50] sm:$0xff]
    %v85 = vld [vmem:[#allocation5 + $0x58] sm:$0xff]
    %v86 = vld [vmem:[#allocation5 + $0x60] sm:$0xff]
    %v87 = vld [vmem:[#allocation5 + $0x68] sm:$0xff]
    %v88 = vld [vmem:[#allocation5 + $0x70] sm:$0xff]
    %v89 = vld [vmem:[#allocation5 + $0x78] sm:$0xff]
    %v90 = vld [vmem:[#allocation5 + $0x80] sm:$0xff]
    %v91 = vld [vmem:[#allocation5 + $0x88] sm:$0xff]
    %v92 = vld [vmem:[#allocation5 + $0x90] sm:$0xff]
    %v93 = vld [vmem:[#allocation5 + $0x98] sm:$0xff]
    %v94 = vld [vmem:[#allocation5 + $0xa0] sm:$0xff]
    %v95 = vld [vmem:[#allocation5 + $0xa8] sm:$0xff]
    %v96 = vld [vmem:[#allocation5 + $0xb0] sm:$0xff]
    %v97 = vld [vmem:[#allocation5 + $0xb8] sm:$0xff]
    %v98 = vld [vmem:[#allocation5 + $0xc0] sm:$0xff]
    %v99 = vld [vmem:[#allocation5 + $0xc8] sm:$0xff]
    %v100 = vld [vmem:[#allocation5 + $0xd0] sm:$0xff]
    %v101 = vld [vmem:[#allocation5 + $0xd8] sm:$0xff]
    %v102 = vld [vmem:[#allocation5 + $0xe0] sm:$0xff]
    %v103 = vld [vmem:[#allocation5 + $0xe8] sm:$0xff]
    %v104 = vld [vmem:[#allocation5 + $0xf0] sm:$0xff]
    %v105 = vld [vmem:[#allocation5 + $0xf8] sm:$0xff]
    %v106 = vld [vmem:[#allocation7] sm:$0xf]
    %v108 = vperm.slane %v106, 0
    %v109 = vperm.slane %v106, 1
    %v110 = vperm.slane %v106, 2
    %v111 = vperm.slane %v106, 3
    %v148 = vunpack.c.l.b16 %v74
    %v149 = vunpack.c.h.b16 %v74
    %v150 = vunpack.c.l.b16 %v75
    %v151 = vunpack.c.h.b16 %v75
    %v152 = vunpack.c.l.b16 %v76
    %v153 = vunpack.c.h.b16 %v76
    %v154 = vunpack.c.l.b16 %v77
    %v155 = vunpack.c.h.b16 %v77
    %v156 = vunpack.c.l.b16 %v78
    %v157 = vunpack.c.h.b16 %v78
    %v158 = vunpack.c.l.b16 %v79
    %v159 = vunpack.c.h.b16 %v79
    %v160 = vunpack.c.l.b16 %v80
    %v161 = vunpack.c.h.b16 %v80
    %v162 = vunpack.c.l.b16 %v81
    %v163 = vunpack.c.h.b16 %v81
    %v164 = vunpack.c.l.b16 %v82
    %v165 = vunpack.c.h.b16 %v82
    %v166 = vunpack.c.l.b16 %v83
    %v167 = vunpack.c.h.b16 %v83
    %v168 = vunpack.c.l.b16 %v84
    %v169 = vunpack.c.h.b16 %v84
    %v170 = vunpack.c.l.b16 %v85
    %v171 = vunpack.c.h.b16 %v85
    %v172 = vunpack.c.l.b16 %v86
    %v173 = vunpack.c.h.b16 %v86
    %v174 = vunpack.c.l.b16 %v87
    %v175 = vunpack.c.h.b16 %v87
    %v176 = vunpack.c.l.b16 %v88
    %v177 = vunpack.c.h.b16 %v88
    %v178 = vunpack.c.l.b16 %v89
    %v179 = vunpack.c.h.b16 %v89
    %v180 = vunpack.c.l.b16 %v90
    %v181 = vunpack.c.h.b16 %v90
    %v182 = vunpack.c.l.b16 %v91
    %v183 = vunpack.c.h.b16 %v91
    %v184 = vunpack.c.l.b16 %v92
    %v185 = vunpack.c.h.b16 %v92
    %v186 = vunpack.c.l.b16 %v93
    %v187 = vunpack.c.h.b16 %v93
    %v188 = vunpack.c.l.b16 %v94
    %v189 = vunpack.c.h.b16 %v94
    %v190 = vunpack.c.l.b16 %v95
    %v191 = vunpack.c.h.b16 %v95
    %v192 = vunpack.c.l.b16 %v96
    %v193 = vunpack.c.h.b16 %v96
    %v194 = vunpack.c.l.b16 %v97
    %v195 = vunpack.c.h.b16 %v97
    %v196 = vunpack.c.l.b16 %v98
    %v197 = vunpack.c.h.b16 %v98
    %v198 = vunpack.c.l.b16 %v99
    %v199 = vunpack.c.h.b16 %v99
    %v200 = vunpack.c.l.b16 %v100
    %v201 = vunpack.c.h.b16 %v100
    %v202 = vunpack.c.l.b16 %v101
    %v203 = vunpack.c.h.b16 %v101
    %v204 = vunpack.c.l.b16 %v102
    %v205 = vunpack.c.h.b16 %v102
    %v206 = vunpack.c.l.b16 %v103
    %v207 = vunpack.c.h.b16 %v103
    %v208 = vunpack.c.l.b16 %v104
    %v209 = vunpack.c.h.b16 %v104
    %v210 = vunpack.c.l.b16 %v105
    %v211 = vunpack.c.h.b16 %v105
    %v212 = vpack.c.b16 %v152, %v148
    %v213 = vpack.c.b16 %v153, %v149
    %v214 = vpack.c.b16 %v154, %v150
    %v215 = vpack.c.b16 %v155, %v151
    %v216 = vpack.c.b16 %v160, %v156
    %v217 = vpack.c.b16 %v161, %v157
    %v218 = vpack.c.b16 %v162, %v158
    %v219 = vpack.c.b16 %v163, %v159
    %v220 = vpack.c.b16 %v168, %v164
    %v221 = vpack.c.b16 %v169, %v165
    %v222 = vpack.c.b16 %v170, %v166
    %v223 = vpack.c.b16 %v171, %v167
    %v224 = vpack.c.b16 %v176, %v172
    %v225 = vpack.c.b16 %v177, %v173
    %v226 = vpack.c.b16 %v178, %v174
    %v227 = vpack.c.b16 %v179, %v175
    %v228 = vpack.c.b16 %v184, %v180
    %v229 = vpack.c.b16 %v185, %v181
    %v230 = vpack.c.b16 %v186, %v182
    %v231 = vpack.c.b16 %v187, %v183
    %v232 = vpack.c.b16 %v192, %v188
    %v233 = vpack.c.b16 %v193, %v189
    %v234 = vpack.c.b16 %v194, %v190
    %v235 = vpack.c.b16 %v195, %v191
    %v236 = vpack.c.b16 %v200, %v196
    %v237 = vpack.c.b16 %v201, %v197
    %v238 = vpack.c.b16 %v202, %v198
    %v239 = vpack.c.b16 %v203, %v199
    %v240 = vpack.c.b16 %v208, %v204
    %v241 = vpack.c.b16 %v209, %v205
    %v242 = vpack.c.b16 %v210, %v206
    %v243 = vpack.c.b16 %v211, %v207
    %276 = vmatpush.bf16.msra.mxu0 %v240
    %277 = vmatpush.bf16.msra.mxu0 %v236
    %278 = vmatpush.bf16.msra.mxu0 %v232
    %279 = vmatpush.bf16.msra.mxu0 %v228
    %280 = vmatpush.bf16.msra.mxu0 %v224
    %281 = vmatpush.bf16.msra.mxu0 %v220
    %282 = vmatpush.bf16.msra.mxu0 %v216
    %283 = vmatpush.bf16.msra.mxu0 %v212
    %284 = vmatmul.bf16.gmra.mxu0 %v69
    %v285 = vpop.f32.mrf.mxu0
    %v286 = vadd.f32 %v108, %v285
    %v287 = vpop.f32.mrf.mxu0
    %v288 = vadd.f32 %v108, %v287
    %289 = vmatmul.bf16.gmra.mxu0 %v70
    %v290 = vpop.f32.mrf.mxu0
    %v291 = vadd.f32 %v108, %v290
    %v292 = vpop.f32.mrf.mxu0
    %v293 = vadd.f32 %v108, %v292
    %294 = vmatmul.bf16.gmra.mxu0 %v71
    %v295 = vpop.f32.mrf.mxu0
    %v296 = vadd.f32 %v108, %v295
    %v297 = vpop.f32.mrf.mxu0
    %v298 = vadd.f32 %v108, %v297
    %299 = vmatmul.bf16.gmra.mxu0 %v72
    %v300 = vpop.f32.mrf.mxu0
    %v301 = vadd.f32 %v108, %v300
    %v302 = vpop.f32.mrf.mxu0
    %v303 = vadd.f32 %v108, %v302
    %304 = vmatmul.bf16.gmra.mxu0 %v73
    %v305 = vpop.f32.mrf.mxu0
    %v306 = vadd.f32 %v108, %v305
    %v307 = vpop.f32.mrf.mxu0
    %308 = vdwg.mxu0
    %309 = vmatpush.bf16.msra.mxu0 %v241
    %310 = vmatpush.bf16.msra.mxu0 %v237
    %311 = vmatpush.bf16.msra.mxu0 %v233
    %312 = vmatpush.bf16.msra.mxu0 %v229
    %313 = vmatpush.bf16.msra.mxu0 %v225
    %314 = vmatpush.bf16.msra.mxu0 %v221
    %315 = vmatpush.bf16.msra.mxu0 %v217
    %316 = vmatpush.bf16.msra.mxu0 %v213
    %317 = vmatmul.bf16.gmra.mxu0 %v69
    %v318 = vpop.f32.mrf.mxu0
    %v319 = vadd.f32 %v109, %v318
    %v320 = vpop.f32.mrf.mxu0
    %v321 = vadd.f32 %v109, %v320
    %322 = vmatmul.bf16.gmra.mxu0 %v70
    %v323 = vpop.f32.mrf.mxu0
    %v324 = vadd.f32 %v109, %v323
    %v325 = vpop.f32.mrf.mxu0
    %v326 = vadd.f32 %v109, %v325
    %327 = vmatmul.bf16.gmra.mxu0 %v71
    %v328 = vpop.f32.mrf.mxu0
    %v329 = vadd.f32 %v109, %v328
    %v330 = vpop.f32.mrf.mxu0
    %v331 = vadd.f32 %v109, %v330
    %332 = vmatmul.bf16.gmra.mxu0 %v72
    %v333 = vpop.f32.mrf.mxu0
    %v334 = vadd.f32 %v109, %v333
    %v335 = vpop.f32.mrf.mxu0
    %v336 = vadd.f32 %v109, %v335
    %337 = vmatmul.bf16.gmra.mxu0 %v73
    %v338 = vpop.f32.mrf.mxu0
    %v339 = vadd.f32 %v109, %v338
    %v340 = vpop.f32.mrf.mxu0
    %341 = vdwg.mxu0
    %342 = vmatpush.bf16.msra.mxu0 %v242
    %343 = vmatpush.bf16.msra.mxu0 %v238
    %344 = vmatpush.bf16.msra.mxu0 %v234
    %345 = vmatpush.bf16.msra.mxu0 %v230
    %346 = vmatpush.bf16.msra.mxu0 %v226
    %347 = vmatpush.bf16.msra.mxu0 %v222
    %348 = vmatpush.bf16.msra.mxu0 %v218
    %349 = vmatpush.bf16.msra.mxu0 %v214
    %350 = vmatmul.bf16.gmra.mxu0 %v69
    %v351 = vpop.f32.mrf.mxu0
    %v352 = vadd.f32 %v110, %v351
    %v353 = vpop.f32.mrf.mxu0
    %v354 = vadd.f32 %v110, %v353
    %355 = vmatmul.bf16.gmra.mxu0 %v70
    %v356 = vpop.f32.mrf.mxu0
    %v357 = vadd.f32 %v110, %v356
    %v358 = vpop.f32.mrf.mxu0
    %v359 = vadd.f32 %v110, %v358
    %360 = vmatmul.bf16.gmra.mxu0 %v71
    %v361 = vpop.f32.mrf.mxu0
    %v362 = vadd.f32 %v110, %v361
    %v363 = vpop.f32.mrf.mxu0
    %v364 = vadd.f32 %v110, %v363
    %365 = vmatmul.bf16.gmra.mxu0 %v72
    %v366 = vpop.f32.mrf.mxu0
    %v367 = vadd.f32 %v110, %v366
    %v368 = vpop.f32.mrf.mxu0
    %v369 = vadd.f32 %v110, %v368
    %370 = vmatmul.bf16.gmra.mxu0 %v73
    %v371 = vpop.f32.mrf.mxu0
    %v372 = vadd.f32 %v110, %v371
    %v373 = vpop.f32.mrf.mxu0
    %374 = vdwg.mxu0
    %375 = vmatpush.bf16.msra.mxu0 %v243
    %376 = vmatpush.bf16.msra.mxu0 %v239
    %377 = vmatpush.bf16.msra.mxu0 %v235
    %378 = vmatpush.bf16.msra.mxu0 %v231
    %379 = vmatpush.bf16.msra.mxu0 %v227
    %380 = vmatpush.bf16.msra.mxu0 %v223
    %381 = vmatpush.bf16.msra.mxu0 %v219
    %382 = vmatpush.bf16.msra.mxu0 %v215
    %383 = vmatmul.bf16.gmra.mxu0 %v69
    %v384 = vpop.f32.mrf.mxu0
    %v385 = vadd.f32 %v111, %v384
    %v386 = vpop.f32.mrf.mxu0
    %v387 = vadd.f32 %v111, %v386
    %388 = vmatmul.bf16.gmra.mxu0 %v70
    %v389 = vpop.f32.mrf.mxu0
    %v390 = vadd.f32 %v111, %v389
    %v391 = vpop.f32.mrf.mxu0
    %v392 = vadd.f32 %v111, %v391
    %393 = vmatmul.bf16.gmra.mxu0 %v71
    %v394 = vpop.f32.mrf.mxu0
    %v395 = vadd.f32 %v111, %v394
    %v396 = vpop.f32.mrf.mxu0
    %v397 = vadd.f32 %v111, %v396
    %398 = vmatmul.bf16.gmra.mxu0 %v72
    %v399 = vpop.f32.mrf.mxu0
    %v400 = vadd.f32 %v111, %v399
    %v401 = vpop.f32.mrf.mxu0
    %v402 = vadd.f32 %v111, %v401
    %403 = vmatmul.bf16.gmra.mxu0 %v73
    %v404 = vpop.f32.mrf.mxu0
    %v405 = vadd.f32 %v111, %v404
    %v406 = vpop.f32.mrf.mxu0
    %407 = vdwg.mxu0
    %408 = vst [vmem:[#allocation8] sm:$0xff] %v286
    %409 = vst [vmem:[#allocation8 + $0x8] sm:$0xff] %v319
    %410 = vst [vmem:[#allocation8 + $0x10] sm:$0xff] %v352
    %411 = vst [vmem:[#allocation8 + $0x18] sm:$0xff] %v385
    %412 = vst [vmem:[#allocation8 + $0x20] sm:$0xff] %v288
    %413 = vst [vmem:[#allocation8 + $0x28] sm:$0xff] %v321
    %414 = vst [vmem:[#allocation8 + $0x30] sm:$0xff] %v354
    %415 = vst [vmem:[#allocation8 + $0x38] sm:$0xff] %v387
    %416 = vst [vmem:[#allocation8 + $0x40] sm:$0xff] %v291
    %417 = vst [vmem:[#allocation8 + $0x48] sm:$0xff] %v324
    %418 = vst [vmem:[#allocation8 + $0x50] sm:$0xff] %v357
    %419 = vst [vmem:[#allocation8 + $0x58] sm:$0xff] %v390
    %420 = vst [vmem:[#allocation8 + $0x60] sm:$0xff] %v293
    %421 = vst [vmem:[#allocation8 + $0x68] sm:$0xff] %v326
    %422 = vst [vmem:[#allocation8 + $0x70] sm:$0xff] %v359
    %423 = vst [vmem:[#allocation8 + $0x78] sm:$0xff] %v392
    %424 = vst [vmem:[#allocation8 + $0x80] sm:$0xff] %v296
    %425 = vst [vmem:[#allocation8 + $0x88] sm:$0xff] %v329
    %426 = vst [vmem:[#allocation8 + $0x90] sm:$0xff] %v362
    %427 = vst [vmem:[#allocation8 + $0x98] sm:$0xff] %v395
    %428 = vst [vmem:[#allocation8 + $0xa0] sm:$0xff] %v298
    %429 = vst [vmem:[#allocation8 + $0xa8] sm:$0xff] %v331
    %430 = vst [vmem:[#allocation8 + $0xb0] sm:$0xff] %v364
    %431 = vst [vmem:[#allocation8 + $0xb8] sm:$0xff] %v397
    %432 = vst [vmem:[#allocation8 + $0xc0] sm:$0xff] %v301
    %433 = vst [vmem:[#allocation8 + $0xc8] sm:$0xff] %v334
    %434 = vst [vmem:[#allocation8 + $0xd0] sm:$0xff] %v367
    %435 = vst [vmem:[#allocation8 + $0xd8] sm:$0xff] %v400
    %436 = vst [vmem:[#allocation8 + $0xe0] sm:$0xff] %v303
    %437 = vst [vmem:[#allocation8 + $0xe8] sm:$0xff] %v336
    %438 = vst [vmem:[#allocation8 + $0xf0] sm:$0xff] %v369
    %439 = vst [vmem:[#allocation8 + $0xf8] sm:$0xff] %v402
    %440 = vst [vmem:[#allocation8 + $0x100] sm:$0xff] %v306
    %441 = vst [vmem:[#allocation8 + $0x108] sm:$0xff] %v339
    %442 = vst [vmem:[#allocation8 + $0x110] sm:$0xff] %v372
    %443 = vst [vmem:[#allocation8 + $0x118] sm:$0xff] %v405
    // Predicated region
    $region26: #{tpu_custom_call.1} parent=1 // pred_check
      _
    $region27: #{tpu_custom_call.1} parent=1 // pred_check_branch
      %445 = sbr.rel (0) target = $region29
    $region28: #{tpu_custom_call.1} parent=1 // pred_region
      %447 = vsyncadd [#allocation4], 0
      %s448 = sshll.u32 [#allocation8], 4
      %s449 = int_to_ptr.vmem [resolvable:$true] %s448
      %s450 = sshll.u32 %s3, 4
      %s451 = int_to_ptr.hbm [resolvable:$true] %s450
      %456 = dma.vmem_to_hbm [thread:$0]  %s449, 4608, %s451, [#allocation4], 512, 512, 32
    $region29: #{tpu_custom_call.1} parent=1 // pred_fallthru
      _
    // Predicated region
    $region30: #{tpu_custom_call.1} parent=1 // pred_check
      _
    $region31: #{tpu_custom_call.1} parent=1 // pred_check_branch
      %458 = sbr.rel (0) target = $region33
    $region32: #{tpu_custom_call.1} parent=1 // pred_region
      %460 = dma.done [#allocation4], 4608
    $region33: #{tpu_custom_call.1} parent=1 // pred_fallthru
      _
    %461 = vsyncpa [#allocation3], 1
    %462 = vsyncpa [#allocation6], 1
    %463 = vsyncpa [#allocation4], 1

</llo_original>
